<compile_context>
chip_gen: v5e
topology: v5e:2x2
jax: 0.10.0
libtpu: 0.0.40
codegen_flags: <defaults>
</compile_context>

<pallas_src>
import functools

import jax
import jax.numpy as jnp
from jax.experimental import pallas as pl
from jax.experimental.pallas import tpu as pltpu

LANE = 128


def _round_up(x, m):
    return ((x + m - 1) // m) * m


def mlp_softmax_kernel(x_ref, w1_ref, b1_ref, w2_ref, b2_ref, o_ref, *, activation):
    # hidden linear (MXU, bf16 operands, f32 accumulation) + activation (f32)
    h = jnp.dot(x_ref[...], w1_ref[...], preferred_element_type=jnp.float32)
    h = h + b1_ref[...]                       # b1 is [1, Hp], broadcasts over batch tile
    if activation == "ReLU":
        h = jnp.maximum(h, 0.0)
    elif activation == "Sigmoid":
        h = jax.nn.sigmoid(h)
    elif activation == "Tanh":
        h = jnp.tanh(h)
    else:
        raise ValueError(f"unknown activation {activation!r}")
    # TODO(synk): train-mode nn.Dropout(p) would use pltpu.prng_seed +
    # pltpu.stateful_bernoulli; eval-mode dropout is identity, so omitted here.

    # output linear (MXU); padded classes carry bias -1e30 so softmax -> 0 there
    logits = jnp.dot(h.astype(w2_ref.dtype), w2_ref[...],
                     preferred_element_type=jnp.float32)
    logits = logits + b2_ref[...]             # b2 is [1, Op]

    # numerically-stable softmax over the lane-dense (multiple-of-128) last dim
    m = jnp.max(logits, axis=-1, keepdims=True)
    e = jnp.exp(logits - m)
    denom = jnp.sum(e, axis=-1, keepdims=True)
    # Exact divide (approx EUP reciprocal broke the row-sum==1 property);
    # this kernel is HBM-bound so the divide costs nothing measurable.
    o_ref[...] = (e / denom).astype(o_ref.dtype)


def prepare_params(w1, b1, w2, b2, *, matmul_dtype=jnp.bfloat16):
    """One-time parameter prep (cache the result; do NOT call per forward).

    Pads the hidden/output lane dims to multiples of 128 and casts the matmul
    weights to `matmul_dtype`.  Padded hidden cols/rows are zero (contribute
    nothing); padded output classes get bias -1e30 so softmax gives exactly 0.
    Weights are in x @ W + b layout (i.e. PyTorch weight.T).
    """
    D, H = w1.shape
    Hin, O = w2.shape
    assert Hin == H
    Hp = _round_up(H, LANE)
    Op = _round_up(O, LANE)

    w1p = jnp.zeros((D, Hp), matmul_dtype).at[:, :H].set(w1.astype(matmul_dtype))
    b1p = jnp.zeros((1, Hp), jnp.float32).at[:, :H].set(
        b1.reshape(1, H).astype(jnp.float32))
    w2p = jnp.zeros((Hp, Op), matmul_dtype).at[:H, :O].set(w2.astype(matmul_dtype))
    b2p = jnp.full((1, Op), -1e30, jnp.float32).at[:, :O].set(
        b2.reshape(1, O).astype(jnp.float32))
    return w1p, b1p, w2p, b2p


def mlp_forward(x, params, *, activation="ReLU", num_classes=None, tb=1024):
    """x: [B, D]; params from prepare_params().

    Computes softmax(act(x @ W1 + b1) @ W2 + b2, axis=-1) (eval-mode forward).
    If num_classes is None, returns the lane-padded (B, Op) probability slab
    (no slice copy); otherwise slices to (B, num_classes).
    """
    w1p, b1p, w2p, b2p = params
    B, D = x.shape
    Din, Hp = w1p.shape
    Hp2, Op = w2p.shape
    assert Din == D and Hp2 == Hp

    # bf16 matmul operands: ideally the caller already supplies x in bf16 so the
    # kernel reads half the HBM bytes; cast here only if needed.
    if x.dtype != w1p.dtype:
        x = x.astype(w1p.dtype)

    # Batch tile: multiple of 16 sublanes (bf16 packing).  No padded x copy;
    # grid = cdiv(B, TB) and the ragged last tile is handled by Pallas
    # (rows are independent, OOB output writes are dropped).
    # v5e/v6e (single TC): big tiles amortize the ~0.35us/step overhead.
    # v7x (2 TCs, 64 MiB VMEM): pass tb ~= B/2 so the parallel axis spans both cores.
    TB = min(tb, _round_up(B, 16))
    grid = (pl.cdiv(B, TB),)

    kernel = functools.partial(mlp_softmax_kernel, activation=activation)

    out = pl.pallas_call(
        kernel,
        out_shape=jax.ShapeDtypeStruct((B, Op), jnp.float32),
        grid=grid,
        in_specs=[
            pl.BlockSpec((TB, D), lambda i: (i, 0)),     # x tile marches over batch
            # Constant index_map -> weights/biases stay resident in VMEM across
            # grid steps.  (Optional micro-opt: pipeline_mode=pl.Buffered(1) to
            # drop their dead second buffer.)
            pl.BlockSpec((D, Hp), lambda i: (0, 0)),
            pl.BlockSpec((1, Hp), lambda i: (0, 0)),
            pl.BlockSpec((Hp, Op), lambda i: (0, 0)),
            pl.BlockSpec((1, Op), lambda i: (0, 0)),
        ],
        out_specs=pl.BlockSpec((TB, Op), lambda i: (i, 0)),
        compiler_params=pltpu.CompilerParams(
            dimension_semantics=("parallel",),           # shard batch across TCs (v7x)
        ),
    )(x, w1p, b1p, w2p, b2p)

    if num_classes is None:
        return out
    return out[:, :num_classes]


if __name__ == "__main__":
    # Shapes consistent with the module: MNIST-flattened input, hidden_neurons
    # slider value (multiple of 32), 10 output classes, eval-mode forward.
    B = 128        # eval batch (one whole-batch tile)
    D = 784        # mnist_dim (28*28) -- left unpadded
    H = 64         # hidden_neurons    -- lane-padded to 128 in prepare_params
    O = 10         # output_dim        -- lane-padded to 128, -1e30 bias fill

    key = jax.random.PRNGKey(0)
    kx, kw1, kb1, kw2, kb2 = jax.random.split(key, 5)

    # nn.Linear-style U(-1/sqrt(fan_in), 1/sqrt(fan_in)) init, x @ W + b layout.
    bound1 = 1.0 / (D ** 0.5)
    w1 = jax.random.uniform(kw1, (D, H), jnp.float32, -bound1, bound1)
    b1 = jax.random.uniform(kb1, (H,), jnp.float32, -bound1, bound1)
    bound2 = 1.0 / (H ** 0.5)
    w2 = jax.random.uniform(kw2, (H, O), jnp.float32, -bound2, bound2)
    b2 = jax.random.uniform(kb2, (O,), jnp.float32, -bound2, bound2)

    x = jax.random.normal(kx, (B, D), jnp.float32)

    params = prepare_params(w1, b1, w2, b2)          # one-time prep (cache in real use)
    out = mlp_forward(x, params, activation="ReLU", num_classes=O, tb=1024)
    out = jax.block_until_ready(out)
    assert out.shape == (B, O)

    # exact softmax divide -> each row sums to 1 up to f32 rounding
    assert jnp.allclose(jnp.sum(out, axis=-1), 1.0, atol=1e-3)

    # pure-JAX f32 reference (eval-mode forward); kernel uses bf16 matmul
    # operands with f32 accumulation, so allow for the bf16 operand rounding.
    ref = jax.nn.softmax(jnp.maximum(x @ w1 + b1, 0.0) @ w2 + b2, axis=-1)
    assert jnp.allclose(out, ref, atol=1e-2)

    print("KERNEL_OK")
</pallas_src>

<mosaic_0001>
module attributes {stable_mosaic.version = 11 : i64} {
  func.func @mlp_softmax_kernel(%arg0: i32, %arg1: memref<128x784xbf16, #tpu.memory_space<vmem>>, %arg2: memref<784x128xbf16, #tpu.memory_space<vmem>>, %arg3: memref<1x128xf32, #tpu.memory_space<vmem>>, %arg4: memref<128x128xbf16, #tpu.memory_space<vmem>>, %arg5: memref<1x128xf32, #tpu.memory_space<vmem>>, %arg6: memref<128x128xf32, #tpu.memory_space<vmem>>) attributes {dimension_semantics = [#tpu.dimension_semantics<parallel>], iteration_bounds = array<i64: 1>, scalar_prefetch = 0 : i64, scratch_operands = 0 : i64, tpu.core_type = #tpu.core_type<tc>, window_params = [{transform_indices = @transform_0, window_bounds = array<i64: 128, 784>}, {pipeline_mode = #tpu.pipeline_mode<synchronous>, transform_indices = @transform_1, window_bounds = array<i64: 784, 128>}, {pipeline_mode = #tpu.pipeline_mode<synchronous>, transform_indices = @transform_2, window_bounds = array<i64: 1, 128>}, {pipeline_mode = #tpu.pipeline_mode<synchronous>, transform_indices = @transform_3, window_bounds = array<i64: 128, 128>}, {pipeline_mode = #tpu.pipeline_mode<synchronous>, transform_indices = @transform_4, window_bounds = array<i64: 1, 128>}, {transform_indices = @transform_5, window_bounds = array<i64: 128, 128>}]} {
    %c0 = arith.constant 0 : index
    %c0_0 = arith.constant 0 : index
    %0 = vector.load %arg1[%c0, %c0_0] : memref<128x784xbf16, #tpu.memory_space<vmem>>, vector<128x784xbf16>
    %c0_1 = arith.constant 0 : index
    %c0_2 = arith.constant 0 : index
    %1 = vector.load %arg2[%c0_1, %c0_2] : memref<784x128xbf16, #tpu.memory_space<vmem>>, vector<784x128xbf16>
    %cst = arith.constant dense<0.000000e+00> : vector<128x128xf32>
    %2 = tpu.matmul %0, %1, %cst {dimension_numbers = #tpu.dot_dimension_numbers<[1], [0], [0], [1], [0, 0, 1, 1], [], []>} : vector<128x784xbf16>, vector<784x128xbf16>, vector<128x128xf32> -> vector<128x128xf32>
    %c0_3 = arith.constant 0 : index
    %c0_4 = arith.constant 0 : index
    %3 = vector.load %arg3[%c0_3, %c0_4] : memref<1x128xf32, #tpu.memory_space<vmem>>, vector<1x128xf32>
    %4 = vector.broadcast %3 : vector<1x128xf32> to vector<128x128xf32>
    %5 = arith.addf %2, %4 : vector<128x128xf32>
    %cst_5 = arith.constant 0.000000e+00 : f32
    %6 = vector.broadcast %cst_5 : f32 to vector<128x128xf32>
    %7 = arith.maximumf %5, %6 : vector<128x128xf32>
    %8 = arith.truncf %7 : vector<128x128xf32> to vector<128x128xbf16>
    %c0_6 = arith.constant 0 : index
    %c0_7 = arith.constant 0 : index
    %9 = vector.load %arg4[%c0_6, %c0_7] : memref<128x128xbf16, #tpu.memory_space<vmem>>, vector<128x128xbf16>
    %cst_8 = arith.constant dense<0.000000e+00> : vector<128x128xf32>
    %10 = tpu.matmul %8, %9, %cst_8 {dimension_numbers = #tpu.dot_dimension_numbers<[1], [0], [0], [1], [0, 0, 1, 1], [], []>} : vector<128x128xbf16>, vector<128x128xbf16>, vector<128x128xf32> -> vector<128x128xf32>
    %c0_9 = arith.constant 0 : index
    %c0_10 = arith.constant 0 : index
    %11 = vector.load %arg5[%c0_9, %c0_10] : memref<1x128xf32, #tpu.memory_space<vmem>>, vector<1x128xf32>
    %12 = vector.broadcast %11 : vector<1x128xf32> to vector<128x128xf32>
    %13 = arith.addf %10, %12 : vector<128x128xf32>
    %cst_11 = arith.constant dense<0xFF800000> : vector<128xf32>
    %14 = vector.multi_reduction <maximumf>, %13, %cst_11 [1] : vector<128x128xf32> to vector<128xf32>
    %15 = vector.shape_cast %14 : vector<128xf32> to vector<128x1xf32>
    %16 = vector.broadcast %15 : vector<128x1xf32> to vector<128x128xf32>
    %17 = arith.subf %13, %16 : vector<128x128xf32>
    %18 = math.exp %17 : vector<128x128xf32>
    %cst_12 = arith.constant dense<0.000000e+00> : vector<128xf32>
    %19 = vector.multi_reduction <add>, %18, %cst_12 [1] : vector<128x128xf32> to vector<128xf32>
    %20 = vector.shape_cast %19 : vector<128xf32> to vector<128x1xf32>
    %21 = vector.broadcast %20 : vector<128x1xf32> to vector<128x128xf32>
    %22 = arith.divf %18, %21 : vector<128x128xf32>
    %c0_13 = arith.constant 0 : index
    %c0_14 = arith.constant 0 : index
    %23 = vector.load %arg6[%c0_13, %c0_14] : memref<128x128xf32, #tpu.memory_space<vmem>>, vector<128x128xf32>
    tpu.vector_store %arg6[%c0_13, %c0_14], %22 {strides = array<i32>} : memref<128x128xf32, #tpu.memory_space<vmem>>, vector<128x128xf32>,
    return
  }
  func.func @transform_0(%arg0: i32) -> (i32, i32) {
    %c0_i32 = arith.constant 0 : i32
    %c0_i32_0 = arith.constant 0 : i32
    return %arg0, %c0_i32 : i32, i32
  }
  func.func @transform_1(%arg0: i32) -> (i32, i32) {
    %c0_i32 = arith.constant 0 : i32
    %c0_i32_0 = arith.constant 0 : i32
    %c0_i32_1 = arith.constant 0 : i32
    return %c0_i32, %c0_i32_0 : i32, i32
  }
  func.func @transform_2(%arg0: i32) -> (i32, i32) {
    %c0_i32 = arith.constant 0 : i32
    %c0_i32_0 = arith.constant 0 : i32
    %c0_i32_1 = arith.constant 0 : i32
    return %c0_i32, %c0_i32_0 : i32, i32
  }
  func.func @transform_3(%arg0: i32) -> (i32, i32) {
    %c0_i32 = arith.constant 0 : i32
    %c0_i32_0 = arith.constant 0 : i32
    %c0_i32_1 = arith.constant 0 : i32
    return %c0_i32, %c0_i32_0 : i32, i32
  }
  func.func @transform_4(%arg0: i32) -> (i32, i32) {
    %c0_i32 = arith.constant 0 : i32
    %c0_i32_0 = arith.constant 0 : i32
    %c0_i32_1 = arith.constant 0 : i32
    return %c0_i32, %c0_i32_0 : i32, i32
  }
  func.func @transform_5(%arg0: i32) -> (i32, i32) {
    %c0_i32 = arith.constant 0 : i32
    %c0_i32_0 = arith.constant 0 : i32
    return %arg0, %c0_i32 : i32, i32
  }
}

</mosaic_0001>

<llo_original>
// kernel: tpu_custom_call.1
$region0: #{tpu_custom_call.1}
  #allocation0 [shape = 'u32[]', space=smem, size = 0x4, offset = 0x4, fixed_abs, tag = 'smem constant byte address 0x4 - core index']
  #allocation1 [shape = 'u32[72,128]{1,0:T(1,128)}', space=vmem, size = 0x9000, scoped, tag = 'internal scratch']
  %s0 = inlined_call_operand.vmem [shape: bf16[128,784], index: 0, kind: input, shape index: {}]
  %s1 = inlined_call_operand.vmem [shape: bf16[784,128], index: 1, kind: input, shape index: {}]
  %s2 = inlined_call_operand.vmem [shape: f32[1,128], index: 2, kind: input, shape index: {}]
  %s3 = inlined_call_operand.vmem [shape: bf16[128,128], index: 3, kind: input, shape index: {}]
  %s4 = inlined_call_operand.vmem [shape: f32[1,128], index: 4, kind: input, shape index: {}]
  %s5 = inlined_call_operand.hbm [shape: f32[128,128], index: 5, kind: output, shape index: {}]
  %s6 = sld [smem:[#allocation0]]
  $region30: #{tpu_custom_call.1} parent=0
    _
  %s8 = ssub.s32 1, %s6
  %s9 = scalar_select 0, %s8, %s6
  $region1: #{tpu_custom_call.1} parent=0
    #allocation2 [shape = 'u8[65536]{0}', space=vmem, size = 0x10000, scoped, tag = 'output window, operand 0, single buffered']
    #allocation3 [shape = 's32[1]{0}', space=sflag, size = 0x4, scoped, tag = 'scoped memory for tpu_custom_call.1']
    %10 = vsyncpa [#allocation3], 0
    // Predicated region
    $region2: #{tpu_custom_call.1} parent=1 // pred_check
      _
    $region3: #{tpu_custom_call.1} parent=1 // pred_check_branch
      %12 = sbr.rel (0) target = $region5
    $region4: #{tpu_custom_call.1} parent=1 // pred_region
      _
    $region5: #{tpu_custom_call.1} parent=1 // pred_fallthru
      _
    // Predicated region
    $region6: #{tpu_custom_call.1} parent=1 // pred_check
      _
    $region7: #{tpu_custom_call.1} parent=1 // pred_check_branch
      %14 = sbr.rel (0) target = $region9
    $region8: #{tpu_custom_call.1} parent=1 // pred_region
      _
    $region9: #{tpu_custom_call.1} parent=1 // pred_fallthru
      _
    // Predicated region
    $region10: #{tpu_custom_call.1} parent=1 // pred_check
      _
    $region11: #{tpu_custom_call.1} parent=1 // pred_check_branch
      %16 = sbr.rel (0) target = $region13
    $region12: #{tpu_custom_call.1} parent=1 // pred_region
      _
    $region13: #{tpu_custom_call.1} parent=1 // pred_fallthru
      _
    // Predicated region
    $region14: #{tpu_custom_call.1} parent=1 // pred_check
      _
    $region15: #{tpu_custom_call.1} parent=1 // pred_check_branch
      %18 = sbr.rel (0) target = $region17
    $region16: #{tpu_custom_call.1} parent=1 // pred_region
      _
    $region17: #{tpu_custom_call.1} parent=1 // pred_fallthru
      _
    // Predicated region
    $region18: #{tpu_custom_call.1} parent=1 // pred_check
      _
    $region19: #{tpu_custom_call.1} parent=1 // pred_check_branch
      %20 = sbr.rel (0) target = $region21
    $region20: #{tpu_custom_call.1} parent=1 // pred_region
      _
    $region21: #{tpu_custom_call.1} parent=1 // pred_fallthru
      _
    %v22 = vld [vmem:[%s0] sm:$0xff]
    %v23 = vld [vmem:[%s0 + $0x8] sm:$0xff]
    %v24 = vld [vmem:[%s0 + $0x10] sm:$0xff]
    %v25 = vld [vmem:[%s0 + $0x18] sm:$0xf]
    %v26 = vld [vmem:[%s0 + $0x1c] sm:$0xff]
    %v27 = vld [vmem:[%s0 + $0x24] sm:$0xff]
    %v28 = vld [vmem:[%s0 + $0x2c] sm:$0xff]
    %v29 = vld [vmem:[%s0 + $0x34] sm:$0xf]
    %v30 = vld [vmem:[%s0 + $0x38] sm:$0xff]
    %v31 = vld [vmem:[%s0 + $0x40] sm:$0xff]
    %v32 = vld [vmem:[%s0 + $0x48] sm:$0xff]
    %v33 = vld [vmem:[%s0 + $0x50] sm:$0xf]
    %v34 = vld [vmem:[%s0 + $0x54] sm:$0xff]
    %v35 = vld [vmem:[%s0 + $0x5c] sm:$0xff]
    %v36 = vld [vmem:[%s0 + $0x64] sm:$0xff]
    %v37 = vld [vmem:[%s0 + $0x6c] sm:$0xf]
    %v38 = vld [vmem:[%s0 + $0x70] sm:$0xff]
    %v39 = vld [vmem:[%s0 + $0x78] sm:$0xff]
    %v40 = vld [vmem:[%s0 + $0x80] sm:$0xff]
    %v41 = vld [vmem:[%s0 + $0x88] sm:$0xf]
    %v42 = vld [vmem:[%s0 + $0x8c] sm:$0xff]
    %v43 = vld [vmem:[%s0 + $0x94] sm:$0xff]
    %v44 = vld [vmem:[%s0 + $0x9c] sm:$0xff]
    %v45 = vld [vmem:[%s0 + $0xa4] sm:$0xf]
    %v46 = vld [vmem:[%s0 + $0xa8] sm:$0xff]
    %v47 = vld [vmem:[%s0 + $0xb0] sm:$0xff]
    %v48 = vld [vmem:[%s0 + $0xb8] sm:$0xff]
    %v49 = vld [vmem:[%s0 + $0xc0] sm:$0xf]
    %v50 = vld [vmem:[%s0 + $0xc4] sm:$0xff]
    %v51 = vld [vmem:[%s0 + $0xcc] sm:$0xff]
    %v52 = vld [vmem:[%s0 + $0xd4] sm:$0xff]
    %v53 = vld [vmem:[%s0 + $0xdc] sm:$0xf]
    %v54 = vld [vmem:[%s0 + $0xe0] sm:$0xff]
    %v55 = vld [vmem:[%s0 + $0xe8] sm:$0xff]
    %v56 = vld [vmem:[%s0 + $0xf0] sm:$0xff]
    %v57 = vld [vmem:[%s0 + $0xf8] sm:$0xf]
    %v58 = vld [vmem:[%s0 + $0xfc] sm:$0xff]
    %v59 = vld [vmem:[%s0 + $0x104] sm:$0xff]
    %v60 = vld [vmem:[%s0 + $0x10c] sm:$0xff]
    %v61 = vld [vmem:[%s0 + $0x114] sm:$0xf]
    %v62 = vld [vmem:[%s0 + $0x118] sm:$0xff]
    %v63 = vld [vmem:[%s0 + $0x120] sm:$0xff]
    %v64 = vld [vmem:[%s0 + $0x128] sm:$0xff]
    %v65 = vld [vmem:[%s0 + $0x130] sm:$0xf]
    %v66 = vld [vmem:[%s0 + $0x134] sm:$0xff]
    %v67 = vld [vmem:[%s0 + $0x13c] sm:$0xff]
    %v68 = vld [vmem:[%s0 + $0x144] sm:$0xff]
    %v69 = vld [vmem:[%s0 + $0x14c] sm:$0xf]
    %v70 = vld [vmem:[%s0 + $0x150] sm:$0xff]
    %v71 = vld [vmem:[%s0 + $0x158] sm:$0xff]
    %v72 = vld [vmem:[%s0 + $0x160] sm:$0xff]
    %v73 = vld [vmem:[%s0 + $0x168] sm:$0xf]
    %v74 = vld [vmem:[%s0 + $0x16c] sm:$0xff]
    %v75 = vld [vmem:[%s0 + $0x174] sm:$0xff]
    %v76 = vld [vmem:[%s0 + $0x17c] sm:$0xff]
    %v77 = vld [vmem:[%s0 + $0x184] sm:$0xf]
    %v78 = vld [vmem:[%s0 + $0x188] sm:$0xff]
    %v79 = vld [vmem:[%s0 + $0x190] sm:$0xff]
    %v80 = vld [vmem:[%s0 + $0x198] sm:$0xff]
    %v81 = vld [vmem:[%s0 + $0x1a0] sm:$0xf]
    %v82 = vld [vmem:[%s0 + $0x1a4] sm:$0xff]
    %v83 = vld [vmem:[%s0 + $0x1ac] sm:$0xff]
    %v84 = vld [vmem:[%s0 + $0x1b4] sm:$0xff]
    %v85 = vld [vmem:[%s0 + $0x1bc] sm:$0xf]
    %v86 = vld [vmem:[%s1] sm:$0xf]
    %v87 = vld [vmem:[%s1 + $0x4] sm:$0xf]
    %v88 = vld [vmem:[%s1 + $0x8] sm:$0xf]
    %v89 = vld [vmem:[%s1 + $0xc] sm:$0xf]
    %v90 = vld [vmem:[%s1 + $0x10] sm:$0xf]
    %v91 = vld [vmem:[%s1 + $0x14] sm:$0xf]
    %v92 = vld [vmem:[%s1 + $0x18] sm:$0xf]
    %v93 = vld [vmem:[%s1 + $0x1c] sm:$0xf]
    %v94 = vld [vmem:[%s1 + $0x20] sm:$0xf]
    %v95 = vld [vmem:[%s1 + $0x24] sm:$0xf]
    %v96 = vld [vmem:[%s1 + $0x28] sm:$0xf]
    %v97 = vld [vmem:[%s1 + $0x2c] sm:$0xf]
    %v98 = vld [vmem:[%s1 + $0x30] sm:$0xf]
    %v99 = vld [vmem:[%s1 + $0x34] sm:$0xf]
    %v100 = vld [vmem:[%s1 + $0x38] sm:$0xf]
    %v101 = vld [vmem:[%s1 + $0x3c] sm:$0xf]
    %v102 = vld [vmem:[%s1 + $0x40] sm:$0xf]
    %v103 = vld [vmem:[%s1 + $0x44] sm:$0xf]
    %v104 = vld [vmem:[%s1 + $0x48] sm:$0xf]
    %v105 = vld [vmem:[%s1 + $0x4c] sm:$0xf]
    %v106 = vld [vmem:[%s1 + $0x50] sm:$0xf]
    %v107 = vld [vmem:[%s1 + $0x54] sm:$0xf]
    %v108 = vld [vmem:[%s1 + $0x58] sm:$0xf]
    %v109 = vld [vmem:[%s1 + $0x5c] sm:$0xf]
    %v110 = vld [vmem:[%s1 + $0x60] sm:$0xf]
    %v111 = vld [vmem:[%s1 + $0x64] sm:$0xf]
    %v112 = vld [vmem:[%s1 + $0x68] sm:$0xf]
    %v113 = vld [vmem:[%s1 + $0x6c] sm:$0xf]
    %v114 = vld [vmem:[%s1 + $0x70] sm:$0xf]
    %v115 = vld [vmem:[%s1 + $0x74] sm:$0xf]
    %v116 = vld [vmem:[%s1 + $0x78] sm:$0xf]
    %v117 = vld [vmem:[%s1 + $0x7c] sm:$0xf]
    %v118 = vld [vmem:[%s1 + $0x80] sm:$0xf]
    %v119 = vld [vmem:[%s1 + $0x84] sm:$0xf]
    %v120 = vld [vmem:[%s1 + $0x88] sm:$0xf]
    %v121 = vld [vmem:[%s1 + $0x8c] sm:$0xf]
    %v122 = vld [vmem:[%s1 + $0x90] sm:$0xf]
    %v123 = vld [vmem:[%s1 + $0x94] sm:$0xf]
    %v124 = vld [vmem:[%s1 + $0x98] sm:$0xf]
    %v125 = vld [vmem:[%s1 + $0x9c] sm:$0xf]
    %v126 = vld [vmem:[%s1 + $0xa0] sm:$0xf]
    %v127 = vld [vmem:[%s1 + $0xa4] sm:$0xf]
    %v128 = vld [vmem:[%s1 + $0xa8] sm:$0xf]
    %v129 = vld [vmem:[%s1 + $0xac] sm:$0xf]
    %v130 = vld [vmem:[%s1 + $0xb0] sm:$0xf]
    %v131 = vld [vmem:[%s1 + $0xb4] sm:$0xf]
    %v132 = vld [vmem:[%s1 + $0xb8] sm:$0xf]
    %v133 = vld [vmem:[%s1 + $0xbc] sm:$0xf]
    %v134 = vld [vmem:[%s1 + $0xc0] sm:$0xf]
    %v135 = vld [vmem:[%s1 + $0xc4] sm:$0xf]
    %v136 = vld [vmem:[%s1 + $0xc8] sm:$0xf]
    %v137 = vld [vmem:[%s1 + $0xcc] sm:$0xf]
    %v138 = vld [vmem:[%s1 + $0xd0] sm:$0xf]
    %v139 = vld [vmem:[%s1 + $0xd4] sm:$0xf]
    %v140 = vld [vmem:[%s1 + $0xd8] sm:$0xf]
    %v141 = vld [vmem:[%s1 + $0xdc] sm:$0xf]
    %v142 = vld [vmem:[%s1 + $0xe0] sm:$0xf]
    %v143 = vld [vmem:[%s1 + $0xe4] sm:$0xf]
    %v144 = vld [vmem:[%s1 + $0xe8] sm:$0xf]
    %v145 = vld [vmem:[%s1 + $0xec] sm:$0xf]
    %v146 = vld [vmem:[%s1 + $0xf0] sm:$0xf]
    %v147 = vld [vmem:[%s1 + $0xf4] sm:$0xf]
    %v148 = vld [vmem:[%s1 + $0xf8] sm:$0xf]
    %v149 = vld [vmem:[%s1 + $0xfc] sm:$0xf]
    %v150 = vld [vmem:[%s1 + $0x100] sm:$0xf]
    %v151 = vld [vmem:[%s1 + $0x104] sm:$0xf]
    %v152 = vld [vmem:[%s1 + $0x108] sm:$0xf]
    %v153 = vld [vmem:[%s1 + $0x10c] sm:$0xf]
    %v154 = vld [vmem:[%s1 + $0x110] sm:$0xf]
    %v155 = vld [vmem:[%s1 + $0x114] sm:$0xf]
    %v156 = vld [vmem:[%s1 + $0x118] sm:$0xf]
    %v157 = vld [vmem:[%s1 + $0x11c] sm:$0xf]
    %v158 = vld [vmem:[%s1 + $0x120] sm:$0xf]
    %v159 = vld [vmem:[%s1 + $0x124] sm:$0xf]
    %v160 = vld [vmem:[%s1 + $0x128] sm:$0xf]
    %v161 = vld [vmem:[%s1 + $0x12c] sm:$0xf]
    %v162 = vld [vmem:[%s1 + $0x130] sm:$0xf]
    %v163 = vld [vmem:[%s1 + $0x134] sm:$0xf]
    %v164 = vld [vmem:[%s1 + $0x138] sm:$0xf]
    %v165 = vld [vmem:[%s1 + $0x13c] sm:$0xf]
    %v166 = vld [vmem:[%s1 + $0x140] sm:$0xf]
    %v167 = vld [vmem:[%s1 + $0x144] sm:$0xf]
    %v168 = vld [vmem:[%s1 + $0x148] sm:$0xf]
    %v169 = vld [vmem:[%s1 + $0x14c] sm:$0xf]
    %v170 = vld [vmem:[%s1 + $0x150] sm:$0xf]
    %v171 = vld [vmem:[%s1 + $0x154] sm:$0xf]
    %v172 = vld [vmem:[%s1 + $0x158] sm:$0xf]
    %v173 = vld [vmem:[%s1 + $0x15c] sm:$0xf]
    %v174 = vld [vmem:[%s1 + $0x160] sm:$0xf]
    %v175 = vld [vmem:[%s1 + $0x164] sm:$0xf]
    %v176 = vld [vmem:[%s1 + $0x168] sm:$0xf]
    %v177 = vld [vmem:[%s1 + $0x16c] sm:$0xf]
    %v178 = vld [vmem:[%s1 + $0x170] sm:$0xf]
    %v179 = vld [vmem:[%s1 + $0x174] sm:$0xf]
    %v180 = vld [vmem:[%s1 + $0x178] sm:$0xf]
    %v181 = vld [vmem:[%s1 + $0x17c] sm:$0xf]
    %v182 = vld [vmem:[%s1 + $0x180] sm:$0xf]
    %v183 = vld [vmem:[%s1 + $0x184] sm:$0xf]
    %v184 = vld [vmem:[%s2] sm:$0x1]
    %v186 = vperm.slane %v184, 0
    %v252 = vunpack.c.l.b16 %v22
    %v253 = vunpack.c.h.b16 %v22
    %v254 = vunpack.c.l.b16 %v23
    %v255 = vunpack.c.h.b16 %v23
    %v256 = vunpack.c.l.b16 %v24
    %v257 = vunpack.c.h.b16 %v24
    %v258 = vunpack.c.l.b16 %v25
    %v259 = vunpack.c.l.b16 %v26
    %v260 = vunpack.c.h.b16 %v26
    %v261 = vunpack.c.l.b16 %v27
    %v262 = vunpack.c.h.b16 %v27
    %v263 = vunpack.c.l.b16 %v28
    %v264 = vunpack.c.h.b16 %v28
    %v265 = vunpack.c.l.b16 %v29
    %v266 = vunpack.c.l.b16 %v30
    %v267 = vunpack.c.h.b16 %v30
    %v268 = vunpack.c.l.b16 %v31
    %v269 = vunpack.c.h.b16 %v31
    %v270 = vunpack.c.l.b16 %v32
    %v271 = vunpack.c.h.b16 %v32
    %v272 = vunpack.c.l.b16 %v33
    %v273 = vunpack.c.l.b16 %v34
    %v274 = vunpack.c.h.b16 %v34
    %v275 = vunpack.c.l.b16 %v35
    %v276 = vunpack.c.h.b16 %v35
    %v277 = vunpack.c.l.b16 %v36
    %v278 = vunpack.c.h.b16 %v36
    %v279 = vunpack.c.l.b16 %v37
    %v280 = vunpack.c.l.b16 %v38
    %v281 = vunpack.c.h.b16 %v38
    %v282 = vunpack.c.l.b16 %v39
    %v283 = vunpack.c.h.b16 %v39
    %v284 = vunpack.c.l.b16 %v40
    %v285 = vunpack.c.h.b16 %v40
    %v286 = vunpack.c.l.b16 %v41
    %v287 = vunpack.c.l.b16 %v42
    %v288 = vunpack.c.h.b16 %v42
    %v289 = vunpack.c.l.b16 %v43
    %v290 = vunpack.c.h.b16 %v43
    %v291 = vunpack.c.l.b16 %v44
    %v292 = vunpack.c.h.b16 %v44
    %v293 = vunpack.c.l.b16 %v45
    %v294 = vunpack.c.l.b16 %v46
    %v295 = vunpack.c.h.b16 %v46
    %v296 = vunpack.c.l.b16 %v47
    %v297 = vunpack.c.h.b16 %v47
    %v298 = vunpack.c.l.b16 %v48
    %v299 = vunpack.c.h.b16 %v48
    %v300 = vunpack.c.l.b16 %v49
    %v301 = vunpack.c.l.b16 %v50
    %v302 = vunpack.c.h.b16 %v50
    %v303 = vunpack.c.l.b16 %v51
    %v304 = vunpack.c.h.b16 %v51
    %v305 = vunpack.c.l.b16 %v52
    %v306 = vunpack.c.h.b16 %v52
    %v307 = vunpack.c.l.b16 %v53
    %v308 = vunpack.c.l.b16 %v54
    %v309 = vunpack.c.h.b16 %v54
    %v310 = vunpack.c.l.b16 %v55
    %v311 = vunpack.c.h.b16 %v55
    %v312 = vunpack.c.l.b16 %v56
    %v313 = vunpack.c.h.b16 %v56
    %v314 = vunpack.c.l.b16 %v57
    %v315 = vunpack.c.l.b16 %v58
    %v316 = vunpack.c.h.b16 %v58
    %v317 = vunpack.c.l.b16 %v59
    %v318 = vunpack.c.h.b16 %v59
    %v319 = vunpack.c.l.b16 %v60
    %v320 = vunpack.c.h.b16 %v60
    %v321 = vunpack.c.l.b16 %v61
    %v322 = vunpack.c.l.b16 %v62
    %v323 = vunpack.c.h.b16 %v62
    %v324 = vunpack.c.l.b16 %v63
    %v325 = vunpack.c.h.b16 %v63
    %v326 = vunpack.c.l.b16 %v64
    %v327 = vunpack.c.h.b16 %v64
    %v328 = vunpack.c.l.b16 %v65
    %v329 = vunpack.c.l.b16 %v66
    %v330 = vunpack.c.h.b16 %v66
    %v331 = vunpack.c.l.b16 %v67
    %v332 = vunpack.c.h.b16 %v67
    %v333 = vunpack.c.l.b16 %v68
    %v334 = vunpack.c.h.b16 %v68
    %v335 = vunpack.c.l.b16 %v69
    %v336 = vunpack.c.l.b16 %v70
    %v337 = vunpack.c.h.b16 %v70
    %v338 = vunpack.c.l.b16 %v71
    %v339 = vunpack.c.h.b16 %v71
    %v340 = vunpack.c.l.b16 %v72
    %v341 = vunpack.c.h.b16 %v72
    %v342 = vunpack.c.l.b16 %v73
    %v343 = vunpack.c.l.b16 %v74
    %v344 = vunpack.c.h.b16 %v74
    %v345 = vunpack.c.l.b16 %v75
    %v346 = vunpack.c.h.b16 %v75
    %v347 = vunpack.c.l.b16 %v76
    %v348 = vunpack.c.h.b16 %v76
    %v349 = vunpack.c.l.b16 %v77
    %v350 = vunpack.c.l.b16 %v78
    %v351 = vunpack.c.h.b16 %v78
    %v352 = vunpack.c.l.b16 %v79
    %v353 = vunpack.c.h.b16 %v79
    %v354 = vunpack.c.l.b16 %v80
    %v355 = vunpack.c.h.b16 %v80
    %v356 = vunpack.c.l.b16 %v81
    %v357 = vunpack.c.l.b16 %v82
    %v358 = vunpack.c.h.b16 %v82
    %v359 = vunpack.c.l.b16 %v83
    %v360 = vunpack.c.h.b16 %v83
    %v361 = vunpack.c.l.b16 %v84
    %v362 = vunpack.c.h.b16 %v84
    %v363 = vunpack.c.l.b16 %v85
    %v364 = vpack.c.b16 %v259, %v252
    %v365 = vpack.c.b16 %v260, %v253
    %v366 = vpack.c.b16 %v261, %v254
    %v367 = vpack.c.b16 %v262, %v255
    %v368 = vpack.c.b16 %v263, %v256
    %v369 = vpack.c.b16 %v264, %v257
    %v370 = vpack.c.b16 %v265, %v258
    %v371 = vpack.c.b16 %v273, %v266
    %v372 = vpack.c.b16 %v274, %v267
    %v373 = vpack.c.b16 %v275, %v268
    %v374 = vpack.c.b16 %v276, %v269
    %v375 = vpack.c.b16 %v277, %v270
    %v376 = vpack.c.b16 %v278, %v271
    %v377 = vpack.c.b16 %v279, %v272
    %v378 = vpack.c.b16 %v287, %v280
    %v379 = vpack.c.b16 %v288, %v281
    %v380 = vpack.c.b16 %v289, %v282
    %v381 = vpack.c.b16 %v290, %v283
    %v382 = vpack.c.b16 %v291, %v284
    %v383 = vpack.c.b16 %v292, %v285
    %v384 = vpack.c.b16 %v293, %v286
    %v385 = vpack.c.b16 %v301, %v294
    %v386 = vpack.c.b16 %v302, %v295
    %v387 = vpack.c.b16 %v303, %v296
    %v388 = vpack.c.b16 %v304, %v297
    %v389 = vpack.c.b16 %v305, %v298
    %v390 = vpack.c.b16 %v306, %v299
    %v391 = vpack.c.b16 %v307, %v300
    %v392 = vpack.c.b16 %v315, %v308
    %v393 = vpack.c.b16 %v316, %v309
    %v394 = vpack.c.b16 %v317, %v310
    %v395 = vpack.c.b16 %v318, %v311
    %v396 = vpack.c.b16 %v319, %v312
    %v397 = vpack.c.b16 %v320, %v313
    %v398 = vpack.c.b16 %v321, %v314
    %v399 = vpack.c.b16 %v329, %v322
    %v400 = vpack.c.b16 %v330, %v323
    %v401 = vpack.c.b16 %v331, %v324
    %v402 = vpack.c.b16 %v332, %v325
    %v403 = vpack.c.b16 %v333, %v326
    %v404 = vpack.c.b16 %v334, %v327
    %v405 = vpack.c.b16 %v335, %v328
    %v406 = vpack.c.b16 %v343, %v336
    %v407 = vpack.c.b16 %v344, %v337
    %v408 = vpack.c.b16 %v345, %v338
    %v409 = vpack.c.b16 %v346, %v339
    %v410 = vpack.c.b16 %v347, %v340
    %v411 = vpack.c.b16 %v348, %v341
    %v412 = vpack.c.b16 %v349, %v342
    %v413 = vpack.c.b16 %v357, %v350
    %v414 = vpack.c.b16 %v358, %v351
    %v415 = vpack.c.b16 %v359, %v352
    %v416 = vpack.c.b16 %v360, %v353
    %v417 = vpack.c.b16 %v361, %v354
    %v418 = vpack.c.b16 %v362, %v355
    %v419 = vpack.c.b16 %v363, %v356
    %v566 = vunpack.c.l.b16 %v86
    %v567 = vunpack.c.l.b16 %v87
    %v568 = vunpack.c.l.b16 %v88
    %v569 = vunpack.c.l.b16 %v89
    %v570 = vunpack.c.l.b16 %v90
    %v571 = vunpack.c.l.b16 %v91
    %v572 = vunpack.c.l.b16 %v92
    %v573 = vunpack.c.l.b16 %v93
    %v574 = vunpack.c.l.b16 %v94
    %v575 = vunpack.c.l.b16 %v95
    %v576 = vunpack.c.l.b16 %v96
    %v577 = vunpack.c.l.b16 %v97
    %v578 = vunpack.c.l.b16 %v98
    %v579 = vunpack.c.l.b16 %v99
    %v580 = vunpack.c.l.b16 %v100
    %v581 = vunpack.c.l.b16 %v101
    %v582 = vunpack.c.l.b16 %v102
    %v583 = vunpack.c.l.b16 %v103
    %v584 = vunpack.c.l.b16 %v104
    %v585 = vunpack.c.l.b16 %v105
    %v586 = vunpack.c.l.b16 %v106
    %v587 = vunpack.c.l.b16 %v107
    %v588 = vunpack.c.l.b16 %v108
    %v589 = vunpack.c.l.b16 %v109
    %v590 = vunpack.c.l.b16 %v110
    %v591 = vunpack.c.l.b16 %v111
    %v592 = vunpack.c.l.b16 %v112
    %v593 = vunpack.c.l.b16 %v113
    %v594 = vunpack.c.l.b16 %v114
    %v595 = vunpack.c.l.b16 %v115
    %v596 = vunpack.c.l.b16 %v116
    %v597 = vunpack.c.l.b16 %v117
    %v598 = vunpack.c.l.b16 %v118
    %v599 = vunpack.c.l.b16 %v119
    %v600 = vunpack.c.l.b16 %v120
    %v601 = vunpack.c.l.b16 %v121
    %v602 = vunpack.c.l.b16 %v122
    %v603 = vunpack.c.l.b16 %v123
    %v604 = vunpack.c.l.b16 %v124
    %v605 = vunpack.c.l.b16 %v125
    %v606 = vunpack.c.l.b16 %v126
    %v607 = vunpack.c.l.b16 %v127
    %v608 = vunpack.c.l.b16 %v128
    %v609 = vunpack.c.l.b16 %v129
    %v610 = vunpack.c.l.b16 %v130
    %v611 = vunpack.c.l.b16 %v131
    %v612 = vunpack.c.l.b16 %v132
    %v613 = vunpack.c.l.b16 %v133
    %v614 = vunpack.c.l.b16 %v134
    %v615 = vunpack.c.l.b16 %v135
    %v616 = vunpack.c.l.b16 %v136
    %v617 = vunpack.c.l.b16 %v137
    %v618 = vunpack.c.l.b16 %v138
    %v619 = vunpack.c.l.b16 %v139
    %v620 = vunpack.c.l.b16 %v140
    %v621 = vunpack.c.l.b16 %v141
    %v622 = vunpack.c.l.b16 %v142
    %v623 = vunpack.c.l.b16 %v143
    %v624 = vunpack.c.l.b16 %v144
    %v625 = vunpack.c.l.b16 %v145
    %v626 = vunpack.c.l.b16 %v146
    %v627 = vunpack.c.l.b16 %v147
    %v628 = vunpack.c.l.b16 %v148
    %v629 = vunpack.c.l.b16 %v149
    %v630 = vunpack.c.l.b16 %v150
    %v631 = vunpack.c.l.b16 %v151
    %v632 = vunpack.c.l.b16 %v152
    %v633 = vunpack.c.l.b16 %v153
    %v634 = vunpack.c.l.b16 %v154
    %v635 = vunpack.c.l.b16 %v155
    %v636 = vunpack.c.l.b16 %v156
    %v637 = vunpack.c.l.b16 %v157
    %v638 = vunpack.c.l.b16 %v158
    %v639 = vunpack.c.l.b16 %v159
    %v640 = vunpack.c.l.b16 %v160
    %v641 = vunpack.c.l.b16 %v161
    %v642 = vunpack.c.l.b16 %v162
    %v643 = vunpack.c.l.b16 %v163
    %v644 = vunpack.c.l.b16 %v164
    %v645 = vunpack.c.l.b16 %v165
    %v646 = vunpack.c.l.b16 %v166
    %v647 = vunpack.c.l.b16 %v167
    %v648 = vunpack.c.l.b16 %v168
    %v649 = vunpack.c.l.b16 %v169
    %v650 = vunpack.c.l.b16 %v170
    %v651 = vunpack.c.l.b16 %v171
    %v652 = vunpack.c.l.b16 %v172
    %v653 = vunpack.c.l.b16 %v173
    %v654 = vunpack.c.l.b16 %v174
    %v655 = vunpack.c.l.b16 %v175
    %v656 = vunpack.c.l.b16 %v176
    %v657 = vunpack.c.l.b16 %v177
    %v658 = vunpack.c.l.b16 %v178
    %v659 = vunpack.c.l.b16 %v179
    %v660 = vunpack.c.l.b16 %v180
    %v661 = vunpack.c.l.b16 %v181
    %v662 = vunpack.c.l.b16 %v182
    %v663 = vunpack.c.l.b16 %v183
    %v664 = vpack.c.b16 %v567, %v566
    %v665 = vpack.c.b16 %v569, %v568
    %v666 = vpack.c.b16 %v571, %v570
    %v667 = vpack.c.b16 %v573, %v572
    %v668 = vpack.c.b16 %v575, %v574
    %v669 = vpack.c.b16 %v577, %v576
    %v670 = vpack.c.b16 %v579, %v578
    %v671 = vpack.c.b16 %v581, %v580
    %v672 = vpack.c.b16 %v583, %v582
    %v673 = vpack.c.b16 %v585, %v584
    %v674 = vpack.c.b16 %v587, %v586
    %v675 = vpack.c.b16 %v589, %v588
    %v676 = vpack.c.b16 %v591, %v590
    %v677 = vpack.c.b16 %v593, %v592
    %v678 = vpack.c.b16 %v595, %v594
    %v679 = vpack.c.b16 %v597, %v596
    %v680 = vpack.c.b16 %v599, %v598
    %v681 = vpack.c.b16 %v601, %v600
    %v682 = vpack.c.b16 %v603, %v602
    %v683 = vpack.c.b16 %v605, %v604
    %v684 = vpack.c.b16 %v607, %v606
    %v685 = vpack.c.b16 %v609, %v608
    %v686 = vpack.c.b16 %v611, %v610
    %v687 = vpack.c.b16 %v613, %v612
    %v688 = vpack.c.b16 %v615, %v614
    %v689 = vpack.c.b16 %v617, %v616
    %v690 = vpack.c.b16 %v619, %v618
    %v691 = vpack.c.b16 %v621, %v620
    %v692 = vpack.c.b16 %v623, %v622
    %v693 = vpack.c.b16 %v625, %v624
    %v694 = vpack.c.b16 %v627, %v626
    %v695 = vpack.c.b16 %v629, %v628
    %v696 = vpack.c.b16 %v631, %v630
    %v697 = vpack.c.b16 %v633, %v632
    %v698 = vpack.c.b16 %v635, %v634
    %v699 = vpack.c.b16 %v637, %v636
    %v700 = vpack.c.b16 %v639, %v638
    %v701 = vpack.c.b16 %v641, %v640
    %v702 = vpack.c.b16 %v643, %v642
    %v703 = vpack.c.b16 %v645, %v644
    %v704 = vpack.c.b16 %v647, %v646
    %v705 = vpack.c.b16 %v649, %v648
    %v706 = vpack.c.b16 %v651, %v650
    %v707 = vpack.c.b16 %v653, %v652
    %v708 = vpack.c.b16 %v655, %v654
    %v709 = vpack.c.b16 %v657, %v656
    %v710 = vpack.c.b16 %v659, %v658
    %v711 = vpack.c.b16 %v661, %v660
    %v712 = vpack.c.b16 %v663, %v662
    %vm762 = vcmask 130048
    %v764 = vsel %vm762, %v370, 0
    %v767 = vsel %vm762, %v377, 0
    %v770 = vsel %vm762, %v384, 0
    %v773 = vsel %vm762, %v391, 0
    %v776 = vsel %vm762, %v398, 0
    %v779 = vsel %vm762, %v405, 0
    %v782 = vsel %vm762, %v412, 0
    %v785 = vsel %vm762, %v419, 0
    %787 = vmatpush.bf16.msra.mxu0 %v671
    %788 = vmatpush.bf16.msra.mxu0 %v670
    %789 = vmatpush.bf16.msra.mxu0 %v669
    %790 = vmatpush.bf16.msra.mxu0 %v668
    %791 = vmatpush.bf16.msra.mxu0 %v667
    %792 = vmatpush.bf16.msra.mxu0 %v666
    %793 = vmatpush.bf16.msra.mxu0 %v665
    %794 = vmatpush.bf16.msra.mxu0 %v664
    %795 = vmatmul.bf16.gmra.mxu0 %v364
    %v796 = vpop.f32.mrf.mxu0
    %v797 = vadd.f32 %v186, %v796
    %v798 = vpop.f32.mrf.mxu0
    %v799 = vadd.f32 %v186, %v798
    %800 = vmatmul.bf16.gmra.mxu0 %v371
    %v801 = vpop.f32.mrf.mxu0
    %v802 = vadd.f32 %v186, %v801
    %v803 = vpop.f32.mrf.mxu0
    %v804 = vadd.f32 %v186, %v803
    %805 = vmatmul.bf16.gmra.mxu0 %v378
    %v806 = vpop.f32.mrf.mxu0
    %v807 = vadd.f32 %v186, %v806
    %v808 = vpop.f32.mrf.mxu0
    %v809 = vadd.f32 %v186, %v808
    %810 = vmatmul.bf16.gmra.mxu0 %v385
    %v811 = vpop.f32.mrf.mxu0
    %v812 = vadd.f32 %v186, %v811
    %v813 = vpop.f32.mrf.mxu0
    %v814 = vadd.f32 %v186, %v813
    %815 = vmatmul.bf16.gmra.mxu0 %v392
    %v816 = vpop.f32.mrf.mxu0
    %v817 = vadd.f32 %v186, %v816
    %v818 = vpop.f32.mrf.mxu0
    %v819 = vadd.f32 %v186, %v818
    %820 = vmatmul.bf16.gmra.mxu0 %v399
    %v821 = vpop.f32.mrf.mxu0
    %v822 = vadd.f32 %v186, %v821
    %v823 = vpop.f32.mrf.mxu0
    %v824 = vadd.f32 %v186, %v823
    %825 = vmatmul.bf16.gmra.mxu0 %v406
    %v826 = vpop.f32.mrf.mxu0
    %v827 = vadd.f32 %v186, %v826
    %v828 = vpop.f32.mrf.mxu0
    %v829 = vadd.f32 %v186, %v828
    %830 = vmatmul.bf16.gmra.mxu0 %v413
    %v831 = vpop.f32.mrf.mxu0
    %v832 = vadd.f32 %v186, %v831
    %v833 = vpop.f32.mrf.mxu0
    %v834 = vadd.f32 %v186, %v833
    %835 = vdwg.mxu0
    %836 = vmatpush.bf16.msra.mxu0 %v679
    %837 = vmatpush.bf16.msra.mxu0 %v678
    %838 = vmatpush.bf16.msra.mxu0 %v677
    %839 = vmatpush.bf16.msra.mxu0 %v676
    %840 = vmatpush.bf16.msra.mxu0 %v675
    %841 = vmatpush.bf16.msra.mxu0 %v674
    %842 = vmatpush.bf16.msra.mxu0 %v673
    %843 = vmatpush.bf16.msra.mxu0 %v672
    %844 = vmatmul.bf16.gmra.mxu0 %v365
    %v845 = vpop.f32.mrf.mxu0
    %v846 = vadd.f32 %v797, %v845
    %v847 = vpop.f32.mrf.mxu0
    %v848 = vadd.f32 %v799, %v847
    %849 = vmatmul.bf16.gmra.mxu0 %v372
    %v850 = vpop.f32.mrf.mxu0
    %v851 = vadd.f32 %v802, %v850
    %v852 = vpop.f32.mrf.mxu0
    %v853 = vadd.f32 %v804, %v852
    %854 = vmatmul.bf16.gmra.mxu0 %v379
    %v855 = vpop.f32.mrf.mxu0
    %v856 = vadd.f32 %v807, %v855
    %v857 = vpop.f32.mrf.mxu0
    %v858 = vadd.f32 %v809, %v857
    %859 = vmatmul.bf16.gmra.mxu0 %v386
    %v860 = vpop.f32.mrf.mxu0
    %v861 = vadd.f32 %v812, %v860
    %v862 = vpop.f32.mrf.mxu0
    %v863 = vadd.f32 %v814, %v862
    %864 = vmatmul.bf16.gmra.mxu0 %v393
    %v865 = vpop.f32.mrf.mxu0
    %v866 = vadd.f32 %v817, %v865
    %v867 = vpop.f32.mrf.mxu0
    %v868 = vadd.f32 %v819, %v867
    %869 = vmatmul.bf16.gmra.mxu0 %v400
    %v870 = vpop.f32.mrf.mxu0
    %v871 = vadd.f32 %v822, %v870
    %v872 = vpop.f32.mrf.mxu0
    %v873 = vadd.f32 %v824, %v872
    %874 = vmatmul.bf16.gmra.mxu0 %v407
    %v875 = vpop.f32.mrf.mxu0
    %v876 = vadd.f32 %v827, %v875
    %v877 = vpop.f32.mrf.mxu0
    %v878 = vadd.f32 %v829, %v877
    %879 = vmatmul.bf16.gmra.mxu0 %v414
    %v880 = vpop.f32.mrf.mxu0
    %v881 = vadd.f32 %v832, %v880
    %v882 = vpop.f32.mrf.mxu0
    %v883 = vadd.f32 %v834, %v882
    %884 = vdwg.mxu0
    %885 = vmatpush.bf16.msra.mxu0 %v687
    %886 = vmatpush.bf16.msra.mxu0 %v686
    %887 = vmatpush.bf16.msra.mxu0 %v685
    %888 = vmatpush.bf16.msra.mxu0 %v684
    %889 = vmatpush.bf16.msra.mxu0 %v683
    %890 = vmatpush.bf16.msra.mxu0 %v682
    %891 = vmatpush.bf16.msra.mxu0 %v681
    %892 = vmatpush.bf16.msra.mxu0 %v680
    %893 = vmatmul.bf16.gmra.mxu0 %v366
    %v894 = vpop.f32.mrf.mxu0
    %v895 = vadd.f32 %v846, %v894
    %v896 = vpop.f32.mrf.mxu0
    %v897 = vadd.f32 %v848, %v896
    %898 = vmatmul.bf16.gmra.mxu0 %v373
    %v899 = vpop.f32.mrf.mxu0
    %v900 = vadd.f32 %v851, %v899
    %v901 = vpop.f32.mrf.mxu0
    %v902 = vadd.f32 %v853, %v901
    %903 = vmatmul.bf16.gmra.mxu0 %v380
    %v904 = vpop.f32.mrf.mxu0
    %v905 = vadd.f32 %v856, %v904
    %v906 = vpop.f32.mrf.mxu0
    %v907 = vadd.f32 %v858, %v906
    %908 = vmatmul.bf16.gmra.mxu0 %v387
    %v909 = vpop.f32.mrf.mxu0
    %v910 = vadd.f32 %v861, %v909
    %v911 = vpop.f32.mrf.mxu0
    %v912 = vadd.f32 %v863, %v911
    %913 = vmatmul.bf16.gmra.mxu0 %v394
    %v914 = vpop.f32.mrf.mxu0
    %v915 = vadd.f32 %v866, %v914
    %v916 = vpop.f32.mrf.mxu0
    %v917 = vadd.f32 %v868, %v916
    %918 = vmatmul.bf16.gmra.mxu0 %v401
    %v919 = vpop.f32.mrf.mxu0
    %v920 = vadd.f32 %v871, %v919
    %v921 = vpop.f32.mrf.mxu0
    %v922 = vadd.f32 %v873, %v921
    %923 = vmatmul.bf16.gmra.mxu0 %v408
    %v924 = vpop.f32.mrf.mxu0
    %v925 = vadd.f32 %v876, %v924
    %v926 = vpop.f32.mrf.mxu0
    %v927 = vadd.f32 %v878, %v926
    %928 = vmatmul.bf16.gmra.mxu0 %v415
    %v929 = vpop.f32.mrf.mxu0
    %v930 = vadd.f32 %v881, %v929
    %v931 = vpop.f32.mrf.mxu0
    %v932 = vadd.f32 %v883, %v931
    %933 = vdwg.mxu0
    %934 = vmatpush.bf16.msra.mxu0 %v695
    %935 = vmatpush.bf16.msra.mxu0 %v694
    %936 = vmatpush.bf16.msra.mxu0 %v693
    %937 = vmatpush.bf16.msra.mxu0 %v692
    %938 = vmatpush.bf16.msra.mxu0 %v691
    %939 = vmatpush.bf16.msra.mxu0 %v690
    %940 = vmatpush.bf16.msra.mxu0 %v689
    %941 = vmatpush.bf16.msra.mxu0 %v688
    %942 = vmatmul.bf16.gmra.mxu0 %v367
    %v943 = vpop.f32.mrf.mxu0
    %v944 = vadd.f32 %v895, %v943
    %v945 = vpop.f32.mrf.mxu0
    %v946 = vadd.f32 %v897, %v945
    %947 = vmatmul.bf16.gmra.mxu0 %v374
    %v948 = vpop.f32.mrf.mxu0
    %v949 = vadd.f32 %v900, %v948
    %v950 = vpop.f32.mrf.mxu0
    %v951 = vadd.f32 %v902, %v950
    %952 = vmatmul.bf16.gmra.mxu0 %v381
    %v953 = vpop.f32.mrf.mxu0
    %v954 = vadd.f32 %v905, %v953
    %v955 = vpop.f32.mrf.mxu0
    %v956 = vadd.f32 %v907, %v955
    %957 = vmatmul.bf16.gmra.mxu0 %v388
    %v958 = vpop.f32.mrf.mxu0
    %v959 = vadd.f32 %v910, %v958
    %v960 = vpop.f32.mrf.mxu0
    %v961 = vadd.f32 %v912, %v960
    %962 = vmatmul.bf16.gmra.mxu0 %v395
    %v963 = vpop.f32.mrf.mxu0
    %v964 = vadd.f32 %v915, %v963
    %v965 = vpop.f32.mrf.mxu0
    %v966 = vadd.f32 %v917, %v965
    %967 = vmatmul.bf16.gmra.mxu0 %v402
    %v968 = vpop.f32.mrf.mxu0
    %v969 = vadd.f32 %v920, %v968
    %v970 = vpop.f32.mrf.mxu0
    %v971 = vadd.f32 %v922, %v970
    %972 = vmatmul.bf16.gmra.mxu0 %v409
    %v973 = vpop.f32.mrf.mxu0
    %v974 = vadd.f32 %v925, %v973
    %v975 = vpop.f32.mrf.mxu0
    %v976 = vadd.f32 %v927, %v975
    %977 = vmatmul.bf16.gmra.mxu0 %v416
    %v978 = vpop.f32.mrf.mxu0
    %v979 = vadd.f32 %v930, %v978
    %v980 = vpop.f32.mrf.mxu0
    %v981 = vadd.f32 %v932, %v980
    %982 = vdwg.mxu0
    %983 = vmatpush.bf16.msra.mxu0 %v703
    %984 = vmatpush.bf16.msra.mxu0 %v702
    %985 = vmatpush.bf16.msra.mxu0 %v701
    %986 = vmatpush.bf16.msra.mxu0 %v700
    %987 = vmatpush.bf16.msra.mxu0 %v699
    %988 = vmatpush.bf16.msra.mxu0 %v698
    %989 = vmatpush.bf16.msra.mxu0 %v697
    %990 = vmatpush.bf16.msra.mxu0 %v696
    %991 = vmatmul.bf16.gmra.mxu0 %v368
    %v992 = vpop.f32.mrf.mxu0
    %v993 = vadd.f32 %v944, %v992
    %v994 = vpop.f32.mrf.mxu0
    %v995 = vadd.f32 %v946, %v994
    %996 = vmatmul.bf16.gmra.mxu0 %v375
    %v997 = vpop.f32.mrf.mxu0
    %v998 = vadd.f32 %v949, %v997
    %v999 = vpop.f32.mrf.mxu0
    %v1000 = vadd.f32 %v951, %v999
    %1001 = vmatmul.bf16.gmra.mxu0 %v382
    %v1002 = vpop.f32.mrf.mxu0
    %v1003 = vadd.f32 %v954, %v1002
    %v1004 = vpop.f32.mrf.mxu0
    %v1005 = vadd.f32 %v956, %v1004
    %1006 = vmatmul.bf16.gmra.mxu0 %v389
    %v1007 = vpop.f32.mrf.mxu0
    %v1008 = vadd.f32 %v959, %v1007
    %v1009 = vpop.f32.mrf.mxu0
    %v1010 = vadd.f32 %v961, %v1009
    %1011 = vmatmul.bf16.gmra.mxu0 %v396
    %v1012 = vpop.f32.mrf.mxu0
    %v1013 = vadd.f32 %v964, %v1012
    %v1014 = vpop.f32.mrf.mxu0
    %v1015 = vadd.f32 %v966, %v1014
    %1016 = vmatmul.bf16.gmra.mxu0 %v403
    %v1017 = vpop.f32.mrf.mxu0
    %v1018 = vadd.f32 %v969, %v1017
    %v1019 = vpop.f32.mrf.mxu0
    %v1020 = vadd.f32 %v971, %v1019
    %1021 = vmatmul.bf16.gmra.mxu0 %v410
    %v1022 = vpop.f32.mrf.mxu0
    %v1023 = vadd.f32 %v974, %v1022
    %v1024 = vpop.f32.mrf.mxu0
    %v1025 = vadd.f32 %v976, %v1024
    %1026 = vmatmul.bf16.gmra.mxu0 %v417
    %v1027 = vpop.f32.mrf.mxu0
    %v1028 = vadd.f32 %v979, %v1027
    %v1029 = vpop.f32.mrf.mxu0
    %v1030 = vadd.f32 %v981, %v1029
    %1031 = vdwg.mxu0
    %1032 = vmatpush.bf16.msra.mxu0 %v711
    %1033 = vmatpush.bf16.msra.mxu0 %v710
    %1034 = vmatpush.bf16.msra.mxu0 %v709
    %1035 = vmatpush.bf16.msra.mxu0 %v708
    %1036 = vmatpush.bf16.msra.mxu0 %v707
    %1037 = vmatpush.bf16.msra.mxu0 %v706
    %1038 = vmatpush.bf16.msra.mxu0 %v705
    %1039 = vmatpush.bf16.msra.mxu0 %v704
    %1040 = vmatmul.bf16.gmra.mxu0 %v369
    %v1041 = vpop.f32.mrf.mxu0
    %v1042 = vadd.f32 %v993, %v1041
    %v1043 = vpop.f32.mrf.mxu0
    %v1044 = vadd.f32 %v995, %v1043
    %1045 = vmatmul.bf16.gmra.mxu0 %v376
    %v1046 = vpop.f32.mrf.mxu0
    %v1047 = vadd.f32 %v998, %v1046
    %v1048 = vpop.f32.mrf.mxu0
    %v1049 = vadd.f32 %v1000, %v1048
    %1050 = vmatmul.bf16.gmra.mxu0 %v383
    %v1051 = vpop.f32.mrf.mxu0
    %v1052 = vadd.f32 %v1003, %v1051
    %v1053 = vpop.f32.mrf.mxu0
    %v1054 = vadd.f32 %v1005, %v1053
    %1055 = vmatmul.bf16.gmra.mxu0 %v390
    %v1056 = vpop.f32.mrf.mxu0
    %v1057 = vadd.f32 %v1008, %v1056
    %v1058 = vpop.f32.mrf.mxu0
    %v1059 = vadd.f32 %v1010, %v1058
    %1060 = vmatmul.bf16.gmra.mxu0 %v397
    %v1061 = vpop.f32.mrf.mxu0
    %v1062 = vadd.f32 %v1013, %v1061
    %v1063 = vpop.f32.mrf.mxu0
    %v1064 = vadd.f32 %v1015, %v1063
    %1065 = vmatmul.bf16.gmra.mxu0 %v404
    %v1066 = vpop.f32.mrf.mxu0
    %v1067 = vadd.f32 %v1018, %v1066
    %v1068 = vpop.f32.mrf.mxu0
    %v1069 = vadd.f32 %v1020, %v1068
    %1070 = vmatmul.bf16.gmra.mxu0 %v411
    %v1071 = vpop.f32.mrf.mxu0
    %v1072 = vadd.f32 %v1023, %v1071
    %v1073 = vpop.f32.mrf.mxu0
    %v1074 = vadd.f32 %v1025, %v1073
    %1075 = vmatmul.bf16.gmra.mxu0 %v418
    %v1076 = vpop.f32.mrf.mxu0
    %v1077 = vadd.f32 %v1028, %v1076
    %v1078 = vpop.f32.mrf.mxu0
    %v1079 = vadd.f32 %v1030, %v1078
    %1080 = vdwg.mxu0
    %1081 = vmatpush.bf16.msra.mxu0 0
    %1082 = vmatpush.bf16.msra.mxu0 0
    %1083 = vmatpush.bf16.msra.mxu0 0
    %1084 = vmatpush.bf16.msra.mxu0 0
    %1085 = vmatpush.bf16.msra.mxu0 0
    %1086 = vmatpush.bf16.msra.mxu0 0
    %1087 = vmatpush.bf16.msra.mxu0 0
    %1088 = vmatpush.bf16.msra.mxu0 %v712
    %1089 = vmatmul.bf16.gmra.mxu0 %v764
    %v1090 = vpop.f32.mrf.mxu0
    %v1091 = vadd.f32 %v1042, %v1090
    %v1092 = vpop.f32.mrf.mxu0
    %v1093 = vadd.f32 %v1044, %v1092
    %1094 = vmatmul.bf16.gmra.mxu0 %v767
    %v1095 = vpop.f32.mrf.mxu0
    %v1096 = vadd.f32 %v1047, %v1095
    %v1097 = vpop.f32.mrf.mxu0
    %v1098 = vadd.f32 %v1049, %v1097
    %1099 = vmatmul.bf16.gmra.mxu0 %v770
    %v1100 = vpop.f32.mrf.mxu0
    %v1101 = vadd.f32 %v1052, %v1100
    %v1102 = vpop.f32.mrf.mxu0
    %v1103 = vadd.f32 %v1054, %v1102
    %1104 = vmatmul.bf16.gmra.mxu0 %v773
    %v1105 = vpop.f32.mrf.mxu0
    %v1106 = vadd.f32 %v1057, %v1105
    %v1107 = vpop.f32.mrf.mxu0
    %v1108 = vadd.f32 %v1059, %v1107
    %1109 = vmatmul.bf16.gmra.mxu0 %v776
    %v1110 = vpop.f32.mrf.mxu0
    %v1111 = vadd.f32 %v1062, %v1110
    %v1112 = vpop.f32.mrf.mxu0
    %v1113 = vadd.f32 %v1064, %v1112
    %1114 = vmatmul.bf16.gmra.mxu0 %v779
    %v1115 = vpop.f32.mrf.mxu0
    %v1116 = vadd.f32 %v1067, %v1115
    %v1117 = vpop.f32.mrf.mxu0
    %v1118 = vadd.f32 %v1069, %v1117
    %1119 = vmatmul.bf16.gmra.mxu0 %v782
    %v1120 = vpop.f32.mrf.mxu0
    %v1121 = vadd.f32 %v1072, %v1120
    %v1122 = vpop.f32.mrf.mxu0
    %v1123 = vadd.f32 %v1074, %v1122
    %1124 = vmatmul.bf16.gmra.mxu0 %v785
    %v1125 = vpop.f32.mrf.mxu0
    %v1126 = vadd.f32 %v1077, %v1125
    %v1127 = vpop.f32.mrf.mxu0
    %v1128 = vadd.f32 %v1079, %v1127
    %1129 = vdwg.mxu0
    %v1130 = vmax.f32 %v1091, 0.0
    %v1131 = vmax.f32 %v1093, 0.0
    %v1132 = vmax.f32 %v1096, 0.0
    %v1133 = vmax.f32 %v1098, 0.0
    %v1134 = vmax.f32 %v1101, 0.0
    %v1135 = vmax.f32 %v1103, 0.0
    %v1136 = vmax.f32 %v1106, 0.0
    %v1137 = vmax.f32 %v1108, 0.0
    %v1138 = vmax.f32 %v1111, 0.0
    %v1139 = vmax.f32 %v1113, 0.0
    %v1140 = vmax.f32 %v1116, 0.0
    %v1141 = vmax.f32 %v1118, 0.0
    %v1142 = vmax.f32 %v1121, 0.0
    %v1143 = vmax.f32 %v1123, 0.0
    %v1144 = vmax.f32 %v1126, 0.0
    %v1145 = vmax.f32 %v1128, 0.0
    %v1146 = vpack.c.bf16 %v1131, %v1130
    %v1147 = vpack.c.bf16 %v1133, %v1132
    %v1148 = vpack.c.bf16 %v1135, %v1134
    %v1149 = vpack.c.bf16 %v1137, %v1136
    %v1150 = vpack.c.bf16 %v1139, %v1138
    %v1151 = vpack.c.bf16 %v1141, %v1140
    %v1152 = vpack.c.bf16 %v1143, %v1142
    %v1153 = vpack.c.bf16 %v1145, %v1144
    %v1154 = vld [vmem:[%s3] sm:$0xf]
    %v1155 = vld [vmem:[%s3 + $0x4] sm:$0xf]
    %v1156 = vld [vmem:[%s3 + $0x8] sm:$0xf]
    %v1157 = vld [vmem:[%s3 + $0xc] sm:$0xf]
    %v1158 = vld [vmem:[%s3 + $0x10] sm:$0xf]
    %v1159 = vld [vmem:[%s3 + $0x14] sm:$0xf]
    %v1160 = vld [vmem:[%s3 + $0x18] sm:$0xf]
    %v1161 = vld [vmem:[%s3 + $0x1c] sm:$0xf]
    %v1162 = vld [vmem:[%s3 + $0x20] sm:$0xf]
    %v1163 = vld [vmem:[%s3 + $0x24] sm:$0xf]
    %v1164 = vld [vmem:[%s3 + $0x28] sm:$0xf]
    %v1165 = vld [vmem:[%s3 + $0x2c] sm:$0xf]
    %v1166 = vld [vmem:[%s3 + $0x30] sm:$0xf]
    %v1167 = vld [vmem:[%s3 + $0x34] sm:$0xf]
    %v1168 = vld [vmem:[%s3 + $0x38] sm:$0xf]
    %v1169 = vld [vmem:[%s3 + $0x3c] sm:$0xf]
    %v1170 = vld [vmem:[%s4] sm:$0x1]
    %v1172 = vperm.slane %v1170, 0
    %v1190 = vunpack.c.l.b16 %v1154
    %v1191 = vunpack.c.l.b16 %v1155
    %v1192 = vunpack.c.l.b16 %v1156
    %v1193 = vunpack.c.l.b16 %v1157
    %v1194 = vunpack.c.l.b16 %v1158
    %v1195 = vunpack.c.l.b16 %v1159
    %v1196 = vunpack.c.l.b16 %v1160
    %v1197 = vunpack.c.l.b16 %v1161
    %v1198 = vunpack.c.l.b16 %v1162
    %v1199 = vunpack.c.l.b16 %v1163
    %v1200 = vunpack.c.l.b16 %v1164
    %v1201 = vunpack.c.l.b16 %v1165
    %v1202 = vunpack.c.l.b16 %v1166
    %v1203 = vunpack.c.l.b16 %v1167
    %v1204 = vunpack.c.l.b16 %v1168
    %v1205 = vunpack.c.l.b16 %v1169
    %v1206 = vpack.c.b16 %v1191, %v1190
    %v1207 = vpack.c.b16 %v1193, %v1192
    %v1208 = vpack.c.b16 %v1195, %v1194
    %v1209 = vpack.c.b16 %v1197, %v1196
    %v1210 = vpack.c.b16 %v1199, %v1198
    %v1211 = vpack.c.b16 %v1201, %v1200
    %v1212 = vpack.c.b16 %v1203, %v1202
    %v1213 = vpack.c.b16 %v1205, %v1204
    %1222 = vmatpush.bf16.msra.mxu0 %v1213
    %1223 = vmatpush.bf16.msra.mxu0 %v1212
    %1224 = vmatpush.bf16.msra.mxu0 %v1211
    %1225 = vmatpush.bf16.msra.mxu0 %v1210
    %1226 = vmatpush.bf16.msra.mxu0 %v1209
    %1227 = vmatpush.bf16.msra.mxu0 %v1208
    %1228 = vmatpush.bf16.msra.mxu0 %v1207
    %1229 = vmatpush.bf16.msra.mxu0 %v1206
    %1230 = vmatmul.bf16.gmra.mxu0 %v1146
    %v1231 = vpop.f32.mrf.mxu0
    %v1232 = vadd.f32 %v1172, %v1231
    %v1233 = vpop.f32.mrf.mxu0
    %v1234 = vadd.f32 %v1172, %v1233
    %1235 = vmatmul.bf16.gmra.mxu0 %v1147
    %v1236 = vpop.f32.mrf.mxu0
    %v1237 = vadd.f32 %v1172, %v1236
    %v1238 = vpop.f32.mrf.mxu0
    %v1239 = vadd.f32 %v1172, %v1238
    %1240 = vmatmul.bf16.gmra.mxu0 %v1148
    %v1241 = vpop.f32.mrf.mxu0
    %v1242 = vadd.f32 %v1172, %v1241
    %v1243 = vpop.f32.mrf.mxu0
    %v1244 = vadd.f32 %v1172, %v1243
    %1245 = vmatmul.bf16.gmra.mxu0 %v1149
    %v1246 = vpop.f32.mrf.mxu0
    %v1247 = vadd.f32 %v1172, %v1246
    %v1248 = vpop.f32.mrf.mxu0
    %v1249 = vadd.f32 %v1172, %v1248
    %1250 = vmatmul.bf16.gmra.mxu0 %v1150
    %v1251 = vpop.f32.mrf.mxu0
    %v1252 = vadd.f32 %v1172, %v1251
    %v1253 = vpop.f32.mrf.mxu0
    %v1254 = vadd.f32 %v1172, %v1253
    %1255 = vmatmul.bf16.gmra.mxu0 %v1151
    %v1256 = vpop.f32.mrf.mxu0
    %v1257 = vadd.f32 %v1172, %v1256
    %v1258 = vpop.f32.mrf.mxu0
    %v1259 = vadd.f32 %v1172, %v1258
    %1260 = vmatmul.bf16.gmra.mxu0 %v1152
    %v1261 = vpop.f32.mrf.mxu0
    %v1262 = vadd.f32 %v1172, %v1261
    %v1263 = vpop.f32.mrf.mxu0
    %v1264 = vadd.f32 %v1172, %v1263
    %1265 = vmatmul.bf16.gmra.mxu0 %v1153
    %v1266 = vpop.f32.mrf.mxu0
    %v1267 = vadd.f32 %v1172, %v1266
    %v1268 = vpop.f32.mrf.mxu0
    %v1269 = vadd.f32 %v1172, %v1268
    %1270 = vdwg.mxu0
    %1271 = vmax.xlane.f32.xlu0 %v1232
    %v1272 = vpop.xlane.xlu0 %1271
    %1273 = vmax.xlane.f32.xlu0 %v1234
    %v1274 = vpop.xlane.xlu0 %1273
    %1275 = vmax.xlane.f32.xlu0 %v1237
    %v1276 = vpop.xlane.xlu0 %1275
    %1277 = vmax.xlane.f32.xlu0 %v1239
    %v1278 = vpop.xlane.xlu0 %1277
    %1279 = vmax.xlane.f32.xlu0 %v1242
    %v1280 = vpop.xlane.xlu0 %1279
    %1281 = vmax.xlane.f32.xlu0 %v1244
    %v1282 = vpop.xlane.xlu0 %1281
    %1283 = vmax.xlane.f32.xlu0 %v1247
    %v1284 = vpop.xlane.xlu0 %1283
    %1285 = vmax.xlane.f32.xlu0 %v1249
    %v1286 = vpop.xlane.xlu0 %1285
    %1287 = vmax.xlane.f32.xlu0 %v1252
    %v1288 = vpop.xlane.xlu0 %1287
    %1289 = vmax.xlane.f32.xlu0 %v1254
    %v1290 = vpop.xlane.xlu0 %1289
    %1291 = vmax.xlane.f32.xlu0 %v1257
    %v1292 = vpop.xlane.xlu0 %1291
    %1293 = vmax.xlane.f32.xlu0 %v1259
    %v1294 = vpop.xlane.xlu0 %1293
    %1295 = vmax.xlane.f32.xlu0 %v1262
    %v1296 = vpop.xlane.xlu0 %1295
    %1297 = vmax.xlane.f32.xlu0 %v1264
    %v1298 = vpop.xlane.xlu0 %1297
    %1299 = vmax.xlane.f32.xlu0 %v1267
    %v1300 = vpop.xlane.xlu0 %1299
    %1301 = vmax.xlane.f32.xlu0 %v1269
    %v1302 = vpop.xlane.xlu0 %1301
    %v1303 = vsub.f32 %v1232, %v1272
    %v1304 = vsub.f32 %v1234, %v1274
    %v1305 = vsub.f32 %v1237, %v1276
    %v1306 = vsub.f32 %v1239, %v1278
    %v1307 = vsub.f32 %v1242, %v1280
    %v1308 = vsub.f32 %v1244, %v1282
    %v1309 = vsub.f32 %v1247, %v1284
    %v1310 = vsub.f32 %v1249, %v1286
    %v1311 = vsub.f32 %v1252, %v1288
    %v1312 = vsub.f32 %v1254, %v1290
    %v1313 = vsub.f32 %v1257, %v1292
    %v1314 = vsub.f32 %v1259, %v1294
    %v1315 = vsub.f32 %v1262, %v1296
    %v1316 = vsub.f32 %v1264, %v1298
    %v1317 = vsub.f32 %v1267, %v1300
    %v1318 = vsub.f32 %v1269, %v1302
    %v1319 = vmul.f32 %v1303, 1.442695
    %v1320 = vpow.pop %v1319
    %v1321 = vmul.f32 %v1304, 1.442695
    %v1322 = vpow.pop %v1321
    %v1323 = vmul.f32 %v1305, 1.442695
    %v1324 = vpow.pop %v1323
    %v1325 = vmul.f32 %v1306, 1.442695
    %v1326 = vpow.pop %v1325
    %v1327 = vmul.f32 %v1307, 1.442695
    %v1328 = vpow.pop %v1327
    %v1329 = vmul.f32 %v1308, 1.442695
    %v1330 = vpow.pop %v1329
    %v1331 = vmul.f32 %v1309, 1.442695
    %v1332 = vpow.pop %v1331
    %v1333 = vmul.f32 %v1310, 1.442695
    %v1334 = vpow.pop %v1333
    %v1335 = vmul.f32 %v1311, 1.442695
    %v1336 = vpow.pop %v1335
    %v1337 = vmul.f32 %v1312, 1.442695
    %v1338 = vpow.pop %v1337
    %v1339 = vmul.f32 %v1313, 1.442695
    %v1340 = vpow.pop %v1339
    %v1341 = vmul.f32 %v1314, 1.442695
    %v1342 = vpow.pop %v1341
    %v1343 = vmul.f32 %v1315, 1.442695
    %v1344 = vpow.pop %v1343
    %v1345 = vmul.f32 %v1316, 1.442695
    %v1346 = vpow.pop %v1345
    %v1347 = vmul.f32 %v1317, 1.442695
    %v1348 = vpow.pop %v1347
    %v1349 = vmul.f32 %v1318, 1.442695
    %v1350 = vpow.pop %v1349
    %1351 = vadd.xlane.f32.xlu0 %v1320
    %v1352 = vpop.xlane.xlu0 %1351
    %1353 = vadd.xlane.f32.xlu0 %v1322
    %v1354 = vpop.xlane.xlu0 %1353
    %1355 = vadd.xlane.f32.xlu0 %v1324
    %v1356 = vpop.xlane.xlu0 %1355
    %1357 = vadd.xlane.f32.xlu0 %v1326
    %v1358 = vpop.xlane.xlu0 %1357
    %1359 = vadd.xlane.f32.xlu0 %v1328
    %v1360 = vpop.xlane.xlu0 %1359
    %1361 = vadd.xlane.f32.xlu0 %v1330
    %v1362 = vpop.xlane.xlu0 %1361
    %1363 = vadd.xlane.f32.xlu0 %v1332
    %v1364 = vpop.xlane.xlu0 %1363
    %1365 = vadd.xlane.f32.xlu0 %v1334
    %v1366 = vpop.xlane.xlu0 %1365
    %1367 = vadd.xlane.f32.xlu0 %v1336
    %v1368 = vpop.xlane.xlu0 %1367
    %1369 = vadd.xlane.f32.xlu0 %v1338
    %v1370 = vpop.xlane.xlu0 %1369
    %1371 = vadd.xlane.f32.xlu0 %v1340
    %v1372 = vpop.xlane.xlu0 %1371
    %1373 = vadd.xlane.f32.xlu0 %v1342
    %v1374 = vpop.xlane.xlu0 %1373
    %1375 = vadd.xlane.f32.xlu0 %v1344
    %v1376 = vpop.xlane.xlu0 %1375
    %1377 = vadd.xlane.f32.xlu0 %v1346
    %v1378 = vpop.xlane.xlu0 %1377
    %1379 = vadd.xlane.f32.xlu0 %v1348
    %v1380 = vpop.xlane.xlu0 %1379
    %1381 = vadd.xlane.f32.xlu0 %v1350
    %v1382 = vpop.xlane.xlu0 %1381
    %v1383 = vrcp.pop %v1352
    %v1384 = vmul.f32 %v1352, %v1383
    %v1385 = vsub.f32 1.0, %v1384
    %v1386 = vmul.f32 %v1383, %v1385
    %v1387 = vadd.f32 %v1383, %v1386
    %vm1388 = vweird.f32 %v1352
    %vm1389 = vweird.f32 %v1383
    %vm1390 = vmor %vm1388, %vm1389
    %v1391 = vsel %vm1390, %v1383, %v1387
    %v1392 = vand.u32 2147483647, %v1352
    %vm1393 = vcmp.eq.f32.partialorder %v1392, 8.507059e+37
    %v1394 = vand.u32 %v1352, 2147483648
    %v1395 = vor.u32 1.1754944e-38, %v1394
    %v1396 = vsel %vm1393, %v1395, %v1391
    %v1397 = vmul.f32 %v1320, %v1396
    %v1398 = vrcp.pop %v1354
    %v1399 = vmul.f32 %v1354, %v1398
    %v1400 = vsub.f32 1.0, %v1399
    %v1401 = vmul.f32 %v1398, %v1400
    %v1402 = vadd.f32 %v1398, %v1401
    %vm1403 = vweird.f32 %v1354
    %vm1404 = vweird.f32 %v1398
    %vm1405 = vmor %vm1403, %vm1404
    %v1406 = vsel %vm1405, %v1398, %v1402
    %v1407 = vand.u32 2147483647, %v1354
    %vm1408 = vcmp.eq.f32.partialorder %v1407, 8.507059e+37
    %v1409 = vand.u32 %v1354, 2147483648
    %v1410 = vor.u32 1.1754944e-38, %v1409
    %v1411 = vsel %vm1408, %v1410, %v1406
    %v1412 = vmul.f32 %v1322, %v1411
    %v1413 = vrcp.pop %v1356
    %v1414 = vmul.f32 %v1356, %v1413
    %v1415 = vsub.f32 1.0, %v1414
    %v1416 = vmul.f32 %v1413, %v1415
    %v1417 = vadd.f32 %v1413, %v1416
    %vm1418 = vweird.f32 %v1356
    %vm1419 = vweird.f32 %v1413
    %vm1420 = vmor %vm1418, %vm1419
    %v1421 = vsel %vm1420, %v1413, %v1417
    %v1422 = vand.u32 2147483647, %v1356
    %vm1423 = vcmp.eq.f32.partialorder %v1422, 8.507059e+37
    %v1424 = vand.u32 %v1356, 2147483648
    %v1425 = vor.u32 1.1754944e-38, %v1424
    %v1426 = vsel %vm1423, %v1425, %v1421
    %v1427 = vmul.f32 %v1324, %v1426
    %v1428 = vrcp.pop %v1358
    %v1429 = vmul.f32 %v1358, %v1428
    %v1430 = vsub.f32 1.0, %v1429
    %v1431 = vmul.f32 %v1428, %v1430
    %v1432 = vadd.f32 %v1428, %v1431
    %vm1433 = vweird.f32 %v1358
    %vm1434 = vweird.f32 %v1428
    %vm1435 = vmor %vm1433, %vm1434
    %v1436 = vsel %vm1435, %v1428, %v1432
    %v1437 = vand.u32 2147483647, %v1358
    %vm1438 = vcmp.eq.f32.partialorder %v1437, 8.507059e+37
    %v1439 = vand.u32 %v1358, 2147483648
    %v1440 = vor.u32 1.1754944e-38, %v1439
    %v1441 = vsel %vm1438, %v1440, %v1436
    %v1442 = vmul.f32 %v1326, %v1441
    %v1443 = vrcp.pop %v1360
    %v1444 = vmul.f32 %v1360, %v1443
    %v1445 = vsub.f32 1.0, %v1444
    %v1446 = vmul.f32 %v1443, %v1445
    %v1447 = vadd.f32 %v1443, %v1446
    %vm1448 = vweird.f32 %v1360
    %vm1449 = vweird.f32 %v1443
    %vm1450 = vmor %vm1448, %vm1449
    %v1451 = vsel %vm1450, %v1443, %v1447
    %v1452 = vand.u32 2147483647, %v1360
    %vm1453 = vcmp.eq.f32.partialorder %v1452, 8.507059e+37
    %v1454 = vand.u32 %v1360, 2147483648
    %v1455 = vor.u32 1.1754944e-38, %v1454
    %v1456 = vsel %vm1453, %v1455, %v1451
    %v1457 = vmul.f32 %v1328, %v1456
    %v1458 = vrcp.pop %v1362
    %v1459 = vmul.f32 %v1362, %v1458
    %v1460 = vsub.f32 1.0, %v1459
    %v1461 = vmul.f32 %v1458, %v1460
    %v1462 = vadd.f32 %v1458, %v1461
    %vm1463 = vweird.f32 %v1362
    %vm1464 = vweird.f32 %v1458
    %vm1465 = vmor %vm1463, %vm1464
    %v1466 = vsel %vm1465, %v1458, %v1462
    %v1467 = vand.u32 2147483647, %v1362
    %vm1468 = vcmp.eq.f32.partialorder %v1467, 8.507059e+37
    %v1469 = vand.u32 %v1362, 2147483648
    %v1470 = vor.u32 1.1754944e-38, %v1469
    %v1471 = vsel %vm1468, %v1470, %v1466
    %v1472 = vmul.f32 %v1330, %v1471
    %v1473 = vrcp.pop %v1364
    %v1474 = vmul.f32 %v1364, %v1473
    %v1475 = vsub.f32 1.0, %v1474
    %v1476 = vmul.f32 %v1473, %v1475
    %v1477 = vadd.f32 %v1473, %v1476
    %vm1478 = vweird.f32 %v1364
    %vm1479 = vweird.f32 %v1473
    %vm1480 = vmor %vm1478, %vm1479
    %v1481 = vsel %vm1480, %v1473, %v1477
    %v1482 = vand.u32 2147483647, %v1364
    %vm1483 = vcmp.eq.f32.partialorder %v1482, 8.507059e+37
    %v1484 = vand.u32 %v1364, 2147483648
    %v1485 = vor.u32 1.1754944e-38, %v1484
    %v1486 = vsel %vm1483, %v1485, %v1481
    %v1487 = vmul.f32 %v1332, %v1486
    %v1488 = vrcp.pop %v1366
    %v1489 = vmul.f32 %v1366, %v1488
    %v1490 = vsub.f32 1.0, %v1489
    %v1491 = vmul.f32 %v1488, %v1490
    %v1492 = vadd.f32 %v1488, %v1491
    %vm1493 = vweird.f32 %v1366
    %vm1494 = vweird.f32 %v1488
    %vm1495 = vmor %vm1493, %vm1494
    %v1496 = vsel %vm1495, %v1488, %v1492
    %v1497 = vand.u32 2147483647, %v1366
    %vm1498 = vcmp.eq.f32.partialorder %v1497, 8.507059e+37
    %v1499 = vand.u32 %v1366, 2147483648
    %v1500 = vor.u32 1.1754944e-38, %v1499
    %v1501 = vsel %vm1498, %v1500, %v1496
    %v1502 = vmul.f32 %v1334, %v1501
    %v1503 = vrcp.pop %v1368
    %v1504 = vmul.f32 %v1368, %v1503
    %v1505 = vsub.f32 1.0, %v1504
    %v1506 = vmul.f32 %v1503, %v1505
    %v1507 = vadd.f32 %v1503, %v1506
    %vm1508 = vweird.f32 %v1368
    %vm1509 = vweird.f32 %v1503
    %vm1510 = vmor %vm1508, %vm1509
    %v1511 = vsel %vm1510, %v1503, %v1507
    %v1512 = vand.u32 2147483647, %v1368
    %vm1513 = vcmp.eq.f32.partialorder %v1512, 8.507059e+37
    %v1514 = vand.u32 %v1368, 2147483648
    %v1515 = vor.u32 1.1754944e-38, %v1514
    %v1516 = vsel %vm1513, %v1515, %v1511
    %v1517 = vmul.f32 %v1336, %v1516
    %v1518 = vrcp.pop %v1370
    %v1519 = vmul.f32 %v1370, %v1518
    %v1520 = vsub.f32 1.0, %v1519
    %v1521 = vmul.f32 %v1518, %v1520
    %v1522 = vadd.f32 %v1518, %v1521
    %vm1523 = vweird.f32 %v1370
    %vm1524 = vweird.f32 %v1518
    %vm1525 = vmor %vm1523, %vm1524
    %v1526 = vsel %vm1525, %v1518, %v1522
    %v1527 = vand.u32 2147483647, %v1370
    %vm1528 = vcmp.eq.f32.partialorder %v1527, 8.507059e+37
    %v1529 = vand.u32 %v1370, 2147483648
    %v1530 = vor.u32 1.1754944e-38, %v1529
    %v1531 = vsel %vm1528, %v1530, %v1526
    %v1532 = vmul.f32 %v1338, %v1531
    %v1533 = vrcp.pop %v1372
    %v1534 = vmul.f32 %v1372, %v1533
    %v1535 = vsub.f32 1.0, %v1534
    %v1536 = vmul.f32 %v1533, %v1535
    %v1537 = vadd.f32 %v1533, %v1536
    %vm1538 = vweird.f32 %v1372
    %vm1539 = vweird.f32 %v1533
    %vm1540 = vmor %vm1538, %vm1539
    %v1541 = vsel %vm1540, %v1533, %v1537
    %v1542 = vand.u32 2147483647, %v1372
    %vm1543 = vcmp.eq.f32.partialorder %v1542, 8.507059e+37
    %v1544 = vand.u32 %v1372, 2147483648
    %v1545 = vor.u32 1.1754944e-38, %v1544
    %v1546 = vsel %vm1543, %v1545, %v1541
    %v1547 = vmul.f32 %v1340, %v1546
    %v1548 = vrcp.pop %v1374
    %v1549 = vmul.f32 %v1374, %v1548
    %v1550 = vsub.f32 1.0, %v1549
    %v1551 = vmul.f32 %v1548, %v1550
    %v1552 = vadd.f32 %v1548, %v1551
    %vm1553 = vweird.f32 %v1374
    %vm1554 = vweird.f32 %v1548
    %vm1555 = vmor %vm1553, %vm1554
    %v1556 = vsel %vm1555, %v1548, %v1552
    %v1557 = vand.u32 2147483647, %v1374
    %vm1558 = vcmp.eq.f32.partialorder %v1557, 8.507059e+37
    %v1559 = vand.u32 %v1374, 2147483648
    %v1560 = vor.u32 1.1754944e-38, %v1559
    %v1561 = vsel %vm1558, %v1560, %v1556
    %v1562 = vmul.f32 %v1342, %v1561
    %v1563 = vrcp.pop %v1376
    %v1564 = vmul.f32 %v1376, %v1563
    %v1565 = vsub.f32 1.0, %v1564
    %v1566 = vmul.f32 %v1563, %v1565
    %v1567 = vadd.f32 %v1563, %v1566
    %vm1568 = vweird.f32 %v1376
    %vm1569 = vweird.f32 %v1563
    %vm1570 = vmor %vm1568, %vm1569
    %v1571 = vsel %vm1570, %v1563, %v1567
    %v1572 = vand.u32 2147483647, %v1376
    %vm1573 = vcmp.eq.f32.partialorder %v1572, 8.507059e+37
    %v1574 = vand.u32 %v1376, 2147483648
    %v1575 = vor.u32 1.1754944e-38, %v1574
    %v1576 = vsel %vm1573, %v1575, %v1571
    %v1577 = vmul.f32 %v1344, %v1576
    %v1578 = vrcp.pop %v1378
    %v1579 = vmul.f32 %v1378, %v1578
    %v1580 = vsub.f32 1.0, %v1579
    %v1581 = vmul.f32 %v1578, %v1580
    %v1582 = vadd.f32 %v1578, %v1581
    %vm1583 = vweird.f32 %v1378
    %vm1584 = vweird.f32 %v1578
    %vm1585 = vmor %vm1583, %vm1584
    %v1586 = vsel %vm1585, %v1578, %v1582
    %v1587 = vand.u32 2147483647, %v1378
    %vm1588 = vcmp.eq.f32.partialorder %v1587, 8.507059e+37
    %v1589 = vand.u32 %v1378, 2147483648
    %v1590 = vor.u32 1.1754944e-38, %v1589
    %v1591 = vsel %vm1588, %v1590, %v1586
    %v1592 = vmul.f32 %v1346, %v1591
    %v1593 = vrcp.pop %v1380
    %v1594 = vmul.f32 %v1380, %v1593
    %v1595 = vsub.f32 1.0, %v1594
    %v1596 = vmul.f32 %v1593, %v1595
    %v1597 = vadd.f32 %v1593, %v1596
    %vm1598 = vweird.f32 %v1380
    %vm1599 = vweird.f32 %v1593
    %vm1600 = vmor %vm1598, %vm1599
    %v1601 = vsel %vm1600, %v1593, %v1597
    %v1602 = vand.u32 2147483647, %v1380
    %vm1603 = vcmp.eq.f32.partialorder %v1602, 8.507059e+37
    %v1604 = vand.u32 %v1380, 2147483648
    %v1605 = vor.u32 1.1754944e-38, %v1604
    %v1606 = vsel %vm1603, %v1605, %v1601
    %v1607 = vmul.f32 %v1348, %v1606
    %v1608 = vrcp.pop %v1382
    %v1609 = vmul.f32 %v1382, %v1608
    %v1610 = vsub.f32 1.0, %v1609
    %v1611 = vmul.f32 %v1608, %v1610
    %v1612 = vadd.f32 %v1608, %v1611
    %vm1613 = vweird.f32 %v1382
    %vm1614 = vweird.f32 %v1608
    %vm1615 = vmor %vm1613, %vm1614
    %v1616 = vsel %vm1615, %v1608, %v1612
    %v1617 = vand.u32 2147483647, %v1382
    %vm1618 = vcmp.eq.f32.partialorder %v1617, 8.507059e+37
    %v1619 = vand.u32 %v1382, 2147483648
    %v1620 = vor.u32 1.1754944e-38, %v1619
    %v1621 = vsel %vm1618, %v1620, %v1616
    %v1622 = vmul.f32 %v1350, %v1621
    %1623 = vst [vmem:[#allocation2] sm:$0xff] %v1397
    %1624 = vst [vmem:[#allocation2 + $0x8] sm:$0xff] %v1412
    %1625 = vst [vmem:[#allocation2 + $0x10] sm:$0xff] %v1427
    %1626 = vst [vmem:[#allocation2 + $0x18] sm:$0xff] %v1442
    %1627 = vst [vmem:[#allocation2 + $0x20] sm:$0xff] %v1457
    %1628 = vst [vmem:[#allocation2 + $0x28] sm:$0xff] %v1472
    %1629 = vst [vmem:[#allocation2 + $0x30] sm:$0xff] %v1487
    %1630 = vst [vmem:[#allocation2 + $0x38] sm:$0xff] %v1502
    %1631 = vst [vmem:[#allocation2 + $0x40] sm:$0xff] %v1517
    %1632 = vst [vmem:[#allocation2 + $0x48] sm:$0xff] %v1532
    %1633 = vst [vmem:[#allocation2 + $0x50] sm:$0xff] %v1547
    %1634 = vst [vmem:[#allocation2 + $0x58] sm:$0xff] %v1562
    %1635 = vst [vmem:[#allocation2 + $0x60] sm:$0xff] %v1577
    %1636 = vst [vmem:[#allocation2 + $0x68] sm:$0xff] %v1592
    %1637 = vst [vmem:[#allocation2 + $0x70] sm:$0xff] %v1607
    %1638 = vst [vmem:[#allocation2 + $0x78] sm:$0xff] %v1622
    // Predicated region
    $region22: #{tpu_custom_call.1} parent=1 // pred_check
      _
    $region23: #{tpu_custom_call.1} parent=1 // pred_check_branch
      %1640 = sbr.rel (0) target = $region25
    $region24: #{tpu_custom_call.1} parent=1 // pred_region
      %1642 = vsyncadd [#allocation3], 0
      %s1643 = sshll.u32 [#allocation2], 4
      %s1644 = int_to_ptr.vmem [resolvable:$true] %s1643
      %s1645 = sshll.u32 %s5, 4
      %s1646 = int_to_ptr.hbm [resolvable:$true] %s1645
      %1651 = dma.vmem_to_hbm [thread:$0]  %s1644, 2048, %s1646, [#allocation3], 128, 128, 8
    $region25: #{tpu_custom_call.1} parent=1 // pred_fallthru
      _
    // Predicated region
    $region26: #{tpu_custom_call.1} parent=1 // pred_check
      _
    $region27: #{tpu_custom_call.1} parent=1 // pred_check_branch
      %1653 = sbr.rel (0) target = $region29
    $region28: #{tpu_custom_call.1} parent=1 // pred_region
      %1655 = dma.done [#allocation3], 2048
    $region29: #{tpu_custom_call.1} parent=1 // pred_fallthru
      _
    %1656 = vsyncpa [#allocation3], 1

</llo_original>
